<compile_context>
chip_gen: v6e
topology: v6e:2x2x1
jax: 0.10.0
libtpu: 0.0.40
codegen_flags: <defaults>
</compile_context>

<pallas_src>
import jax
import jax.numpy as jnp
from jax.experimental import pallas as pl
from jax.experimental.pallas import tpu as pltpu

EPS = 1e-5  # torch.nn.LayerNorm default


def vam_kernel(x_ref, w_ref, g_ref, b_ref, o_ref):
    x = x_ref[...].astype(jnp.float32)          # (B, C, HWp)
    w = w_ref[...].astype(jnp.float32)          # (1, 1, HWp) lane-dense conv weight
    g = g_ref[...].astype(jnp.float32)          # (1, C, 1)  LayerNorm gamma
    b = b_ref[...].astype(jnp.float32)          # (1, C, 1)  LayerNorm beta

    # Spatial branch: weighted sum over the spatial (lane) axis.
    # VPU multiply + XLU lane reduction; padded lanes have zero weight & zero x.
    s = jnp.sum(x * w, axis=-1, keepdims=True)                   # (B, C, 1)

    # LayerNorm over the channel dim, per sample (biased variance, eps=1e-5).
    mu = jnp.mean(s, axis=1, keepdims=True)                      # (B, 1, 1)
    var = jnp.mean((s - mu) ** 2, axis=1, keepdims=True)         # (B, 1, 1)
    ln = g * (s - mu) * jax.lax.rsqrt(var + EPS) + b             # (B, C, 1)

    # Channel mean at every spatial position (divisor is true C, unpadded).
    m = jnp.mean(x, axis=1, keepdims=True)                       # (B, 1, HWp)

    # Broadcast add (B,C,1) + (B,1,HWp) -> sigmoid gate -> multiply.
    gate = jax.nn.sigmoid(ln + m)                                # (B, C, HWp)
    o_ref[...] = (x * gate).astype(o_ref.dtype)


def _choose_batch_block(n, c, hw_pad, itemsize):
    """Samples per grid step: MiB-scale blocks, >=2 steps when possible, even split."""
    per_sample = max(c * hw_pad * itemsize, 1)
    target = 4 << 20                       # ~4 MiB of x per step (mem-bound sweet spot)
    b = max(1, min(n, target // per_sample))
    if n >= 2:
        b = max(1, min(b, n // 2))         # keep >= 2 grid steps (v7x megacore)
    while n % b != 0:                      # only even splits -> no ragged last block
        b -= 1
    return b


def vam_forward(x, conv_w, gamma, beta):
    """x: (N, C, H, W); conv_w: (H*W,); gamma/beta: (C,)."""
    n, c, h, w = x.shape
    hw = h * w
    hw_pad = max(128, ((hw + 127) // 128) * 128)   # lane-dense last dim

    x2 = x.reshape(n, c, hw)
    w1 = conv_w.astype(jnp.float32)
    if hw_pad != hw:
        # Zero-pad x and the conv weight: padded lanes contribute nothing to s,
        # and padded output positions are sliced off below.
        x2 = jnp.pad(x2, ((0, 0), (0, 0), (0, hw_pad - hw)))
        w1 = jnp.pad(w1, (0, hw_pad - hw))
    w2 = w1.reshape(1, 1, hw_pad)
    g2 = gamma.astype(jnp.float32).reshape(1, c, 1)
    b2 = beta.astype(jnp.float32).reshape(1, c, 1)

    itemsize = jnp.dtype(x.dtype).itemsize
    b_blk = _choose_batch_block(n, c, hw_pad, itemsize)
    grid = (n // b_blk,)

    # VMEM budget: double-buffered in+out blocks plus f32 working set, with
    # headroom; capped well under v7x's 64 MiB physical VMEM.
    # TODO(synk): add an HW-tiled two-pass path (reduce kernel -> gate kernel)
    # for very large C*HW where even a single sample exceeds the VMEM budget.
    blk_in = b_blk * c * hw_pad * itemsize
    blk_f32 = b_blk * c * hw_pad * 4
    vmem_limit = int(min(56 << 20, max(32 << 20, 4 * blk_in + 6 * blk_f32 + (1 << 20))))

    out = pl.pallas_call(
        vam_kernel,
        out_shape=jax.ShapeDtypeStruct((n, c, hw_pad), x.dtype),
        grid_spec=pltpu.PrefetchScalarGridSpec(
            num_scalar_prefetch=0,
            grid=grid,
            in_specs=[
                pl.BlockSpec((b_blk, c, hw_pad), lambda i: (i, 0, 0)),  # x block
                pl.BlockSpec((1, 1, hw_pad), lambda i: (0, 0, 0)),      # conv weight (resident)
                pl.BlockSpec((1, c, 1), lambda i: (0, 0, 0)),           # gamma (resident)
                pl.BlockSpec((1, c, 1), lambda i: (0, 0, 0)),           # beta  (resident)
            ],
            out_specs=pl.BlockSpec((b_blk, c, hw_pad), lambda i: (i, 0, 0)),
        ),
        compiler_params=pltpu.CompilerParams(
            dimension_semantics=("parallel",),
            vmem_limit_bytes=vmem_limit,
        ),
    )(x2, w2, g2, b2)

    if hw_pad != hw:
        out = out[:, :, :hw]
    return out.reshape(n, c, h, w)


def vam_ref(x, conv_w, gamma, beta):
    """Pure-JAX reference mirroring the PyTorch forward."""
    n, c, h, w = x.shape
    xf = x.astype(jnp.float32).reshape(n, c, h * w)
    s = jnp.einsum("ncp,p->nc", xf, conv_w.astype(jnp.float32))
    mu = jnp.mean(s, axis=1, keepdims=True)
    var = jnp.mean((s - mu) ** 2, axis=1, keepdims=True)
    ln = gamma[None, :] * (s - mu) / jnp.sqrt(var + EPS) + beta[None, :]
    m = jnp.mean(x.astype(jnp.float32), axis=1, keepdims=True)   # (n,1,h,w)
    gate = jax.nn.sigmoid(ln[:, :, None, None] + m)
    return (x.astype(jnp.float32) * gate).astype(x.dtype)


if __name__ == "__main__":
    # Shapes implied by the module: n_ch channels, size x size spatial.
    N, n_ch, size = 2, 4, 16

    key = jax.random.PRNGKey(0)
    kx, kw = jax.random.split(key)
    x = jax.random.normal(kx, (N, n_ch, size, size), dtype=jnp.float32)

    # Deterministic parameter init (synthetic; not a checkpoint load).
    conv_w = 0.05 * jax.random.normal(kw, (size * size,), dtype=jnp.float32)
    gamma = jnp.ones((n_ch,), dtype=jnp.float32)   # LayerNorm default weight
    beta = jnp.zeros((n_ch,), dtype=jnp.float32)   # LayerNorm default bias

    out = jax.block_until_ready(vam_forward(x, conv_w, gamma, beta))
    ref = vam_ref(x, conv_w, gamma, beta)
    assert out.shape == (N, n_ch, size, size)
    assert jnp.allclose(out, ref, atol=1e-5, rtol=1e-5)
    print("KERNEL_OK")
</pallas_src>

<mosaic_0001>
module attributes {stable_mosaic.version = 11 : i64} {
  func.func @vam_kernel(%arg0: i32, %arg1: memref<1x4x256xf32, #tpu.memory_space<vmem>>, %arg2: memref<1x1x256xf32, #tpu.memory_space<vmem>>, %arg3: memref<1x4x1xf32, #tpu.memory_space<vmem>>, %arg4: memref<1x4x1xf32, #tpu.memory_space<vmem>>, %arg5: memref<1x4x256xf32, #tpu.memory_space<vmem>>) attributes {dimension_semantics = [#tpu.dimension_semantics<parallel>], iteration_bounds = array<i64: 2>, scalar_prefetch = 0 : i64, scratch_operands = 0 : i64, tpu.core_type = #tpu.core_type<tc>, window_params = [{transform_indices = @transform_0, window_bounds = array<i64: 1, 4, 256>}, {pipeline_mode = #tpu.pipeline_mode<synchronous>, transform_indices = @transform_1, window_bounds = array<i64: 1, 1, 256>}, {pipeline_mode = #tpu.pipeline_mode<synchronous>, transform_indices = @transform_2, window_bounds = array<i64: 1, 4, 1>}, {pipeline_mode = #tpu.pipeline_mode<synchronous>, transform_indices = @transform_3, window_bounds = array<i64: 1, 4, 1>}, {transform_indices = @transform_4, window_bounds = array<i64: 1, 4, 256>}]} {
    %c0 = arith.constant 0 : index
    %c0_0 = arith.constant 0 : index
    %c0_1 = arith.constant 0 : index
    %0 = vector.load %arg1[%c0, %c0_0, %c0_1] : memref<1x4x256xf32, #tpu.memory_space<vmem>>, vector<1x4x256xf32>
    %c0_2 = arith.constant 0 : index
    %c0_3 = arith.constant 0 : index
    %c0_4 = arith.constant 0 : index
    %1 = vector.load %arg2[%c0_2, %c0_3, %c0_4] : memref<1x1x256xf32, #tpu.memory_space<vmem>>, vector<1x1x256xf32>
    %c0_5 = arith.constant 0 : index
    %c0_6 = arith.constant 0 : index
    %c0_7 = arith.constant 0 : index
    %2 = vector.load %arg3[%c0_5, %c0_6, %c0_7] : memref<1x4x1xf32, #tpu.memory_space<vmem>>, vector<1x4x1xf32>
    %c0_8 = arith.constant 0 : index
    %c0_9 = arith.constant 0 : index
    %c0_10 = arith.constant 0 : index
    %3 = vector.load %arg4[%c0_8, %c0_9, %c0_10] : memref<1x4x1xf32, #tpu.memory_space<vmem>>, vector<1x4x1xf32>
    %4 = vector.broadcast %1 : vector<1x1x256xf32> to vector<1x4x256xf32>
    %5 = arith.mulf %0, %4 : vector<1x4x256xf32>
    %cst = arith.constant dense<0.000000e+00> : vector<1x4xf32>
    %6 = vector.multi_reduction <add>, %5, %cst [2] : vector<1x4x256xf32> to vector<1x4xf32>
    %7 = vector.shape_cast %6 : vector<1x4xf32> to vector<1x4x1xf32>
    %cst_11 = arith.constant dense<0.000000e+00> : vector<1x1xf32>
    %8 = vector.multi_reduction <add>, %7, %cst_11 [1] : vector<1x4x1xf32> to vector<1x1xf32>
    %9 = vector.shape_cast %8 : vector<1x1xf32> to vector<1x1x1xf32>
    %cst_12 = arith.constant 4.000000e+00 : f32
    %10 = vector.broadcast %cst_12 : f32 to vector<1x1x1xf32>
    %11 = arith.divf %9, %10 : vector<1x1x1xf32>
    %12 = vector.broadcast %11 : vector<1x1x1xf32> to vector<1x4x1xf32>
    %13 = arith.subf %7, %12 : vector<1x4x1xf32>
    %14 = arith.mulf %13, %13 : vector<1x4x1xf32>
    %cst_13 = arith.constant dense<0.000000e+00> : vector<1x1xf32>
    %15 = vector.multi_reduction <add>, %14, %cst_13 [1] : vector<1x4x1xf32> to vector<1x1xf32>
    %16 = vector.shape_cast %15 : vector<1x1xf32> to vector<1x1x1xf32>
    %cst_14 = arith.constant 4.000000e+00 : f32
    %17 = vector.broadcast %cst_14 : f32 to vector<1x1x1xf32>
    %18 = arith.divf %16, %17 : vector<1x1x1xf32>
    %19 = vector.broadcast %11 : vector<1x1x1xf32> to vector<1x4x1xf32>
    %20 = arith.subf %7, %19 : vector<1x4x1xf32>
    %21 = arith.mulf %2, %20 : vector<1x4x1xf32>
    %cst_15 = arith.constant 9.99999974E-6 : f32
    %22 = vector.broadcast %cst_15 : f32 to vector<1x1x1xf32>
    %23 = arith.addf %18, %22 : vector<1x1x1xf32>
    %24 = math.rsqrt %23 : vector<1x1x1xf32>
    %25 = vector.broadcast %24 : vector<1x1x1xf32> to vector<1x4x1xf32>
    %26 = arith.mulf %21, %25 : vector<1x4x1xf32>
    %27 = arith.addf %26, %3 : vector<1x4x1xf32>
    %cst_16 = arith.constant dense<0.000000e+00> : vector<1x256xf32>
    %28 = vector.multi_reduction <add>, %0, %cst_16 [1] : vector<1x4x256xf32> to vector<1x256xf32>
    %29 = vector.shape_cast %28 : vector<1x256xf32> to vector<1x1x256xf32>
    %cst_17 = arith.constant 4.000000e+00 : f32
    %30 = vector.broadcast %cst_17 : f32 to vector<1x1x256xf32>
    %31 = arith.divf %29, %30 : vector<1x1x256xf32>
    %32 = vector.broadcast %27 : vector<1x4x1xf32> to vector<1x4x256xf32>
    %33 = vector.broadcast %31 : vector<1x1x256xf32> to vector<1x4x256xf32>
    %34 = arith.addf %32, %33 : vector<1x4x256xf32>
    %35 = arith.negf %34 : vector<1x4x256xf32>
    %36 = math.exp %35 : vector<1x4x256xf32>
    %cst_18 = arith.constant 1.000000e+00 : f32
    %37 = vector.broadcast %cst_18 : f32 to vector<1x4x256xf32>
    %38 = arith.addf %37, %36 : vector<1x4x256xf32>
    %39 = arith.divf %37, %38 : vector<1x4x256xf32>
    %40 = arith.mulf %0, %39 : vector<1x4x256xf32>
    %c0_19 = arith.constant 0 : index
    %c0_20 = arith.constant 0 : index
    %c0_21 = arith.constant 0 : index
    %41 = vector.load %arg5[%c0_19, %c0_20, %c0_21] : memref<1x4x256xf32, #tpu.memory_space<vmem>>, vector<1x4x256xf32>
    tpu.vector_store %arg5[%c0_19, %c0_20, %c0_21], %40 {strides = array<i32>} : memref<1x4x256xf32, #tpu.memory_space<vmem>>, vector<1x4x256xf32>,
    return
  }
  func.func @transform_0(%arg0: i32) -> (i32, i32, i32) {
    %c0_i32 = arith.constant 0 : i32
    %c0_i32_0 = arith.constant 0 : i32
    %c0_i32_1 = arith.constant 0 : i32
    return %arg0, %c0_i32, %c0_i32_0 : i32, i32, i32
  }
  func.func @transform_1(%arg0: i32) -> (i32, i32, i32) {
    %c0_i32 = arith.constant 0 : i32
    %c0_i32_0 = arith.constant 0 : i32
    %c0_i32_1 = arith.constant 0 : i32
    %c0_i32_2 = arith.constant 0 : i32
    return %c0_i32, %c0_i32_0, %c0_i32_1 : i32, i32, i32
  }
  func.func @transform_2(%arg0: i32) -> (i32, i32, i32) {
    %c0_i32 = arith.constant 0 : i32
    %c0_i32_0 = arith.constant 0 : i32
    %c0_i32_1 = arith.constant 0 : i32
    %c0_i32_2 = arith.constant 0 : i32
    return %c0_i32, %c0_i32_0, %c0_i32_1 : i32, i32, i32
  }
  func.func @transform_3(%arg0: i32) -> (i32, i32, i32) {
    %c0_i32 = arith.constant 0 : i32
    %c0_i32_0 = arith.constant 0 : i32
    %c0_i32_1 = arith.constant 0 : i32
    %c0_i32_2 = arith.constant 0 : i32
    return %c0_i32, %c0_i32_0, %c0_i32_1 : i32, i32, i32
  }
  func.func @transform_4(%arg0: i32) -> (i32, i32, i32) {
    %c0_i32 = arith.constant 0 : i32
    %c0_i32_0 = arith.constant 0 : i32
    %c0_i32_1 = arith.constant 0 : i32
    return %arg0, %c0_i32, %c0_i32_0 : i32, i32, i32
  }
}

</mosaic_0001>

<llo_original>
// kernel: tpu_custom_call.1
$region0: #{tpu_custom_call.1}
  #allocation0 [shape = 'u32[]', space=smem, size = 0x4, offset = 0x4, fixed_abs, tag = 'smem constant byte address 0x4 - core index']
  #allocation1 [shape = 'u32[144,128]{1,0:T(1,128)}', space=vmem, size = 0x12000, scoped, tag = 'internal scratch']
  %s0 = inlined_call_operand.hbm [shape: f32[2,4,256], index: 0, kind: input, shape index: {}]
  %s1 = inlined_call_operand.vmem [shape: f32[1,1,256], index: 1, kind: input, shape index: {}]
  %s2 = inlined_call_operand.vmem [shape: f32[1,4,1], index: 2, kind: input, shape index: {}]
  %s3 = inlined_call_operand.vmem [shape: f32[1,4,1], index: 3, kind: input, shape index: {}]
  %s4 = inlined_call_operand.hbm [shape: f32[2,4,256], index: 4, kind: output, shape index: {}]
  %s5 = sld [smem:[#allocation0]]
  $region53: #{tpu_custom_call.1} parent=0
    _
  %s7 = ssub.s32 1, %s5
  %s8 = scalar_select 0, %s7, %s5
  $region1: #{tpu_custom_call.1} parent=0
    #allocation2 [shape = 'u8[8192]{0}', space=vmem, size = 0x2000, scoped, tag = 'input window, operand 0']
    #allocation3 [shape = 's32[2]{0}', space=sflag, size = 0x8, scoped, tag = 'scoped memory for tpu_custom_call.1']
    #allocation4 [shape = 's32[2]{0}', space=sflag, size = 0x8, scoped, tag = 'scoped memory for tpu_custom_call.1']
    #allocation5 [shape = 'u8[8192]{0}', space=vmem, size = 0x2000, scoped, tag = 'output window, operand 0']
    %9 = vsyncpa [#allocation3], 0
    %s10 = scalar_lea.sflag [#allocation3], 1
    %11 = vsyncpa %s10, 0
    %12 = vsyncpa [#allocation4], 0
    %s13 = scalar_lea.sflag [#allocation4], 1
    %14 = vsyncpa %s13, 0
    loop: start=0, step=1, limit=4
    $region2: #{tpu_custom_call.1} parent=1 // loop_pre_header
      _
    $region3: #{tpu_custom_call.1} parent=1 // loop_header
      %s16 = sphi 0, %s20
      %p17 = scmp.ge.s32.totalorder %s16, 4
      %s26 = sphi 0, %s28
      %s29 = sphi 0, %s26
      %s30 = sphi 0, %s29
      %s46 = sphi 0, %s30
      %s50 = sphi 0, %s50
      %s52 = sphi 0, %s50
      %s53 = sphi 0, %s52
      %s67 = sphi 0, %s53
      %s71 = sphi 0, %s71
      %s73 = sphi 0, %s71
      %s74 = sphi 0, %s73
      %s88 = sphi 0, %s74
      %s92 = sphi 0, %s92
      %s94 = sphi 0, %s92
      %s95 = sphi 0, %s94
      %s109 = sphi 0, %s95
      %s115 = sphi 0, %s117
      %s118 = sphi 0, %s115
      %s119 = sphi 0, %s118
      %s135 = sphi 0, %s119
    $region4: #{tpu_custom_call.1} parent=1 // loop_header_branch
      %19 = sbr.rel (%p17) target = $region8
    $region5: #{tpu_custom_call.1} parent=1 // loop_body
      %s21 = ssub.s32 %s16, 1
      %s22 = ssub.s32 %s16, 2
      %s23 = sadd.s32 %s16, 1
      %s24 = ssub.s32 %s16, %s23
      %p25 = scmp.eq.s32.totalorder %s24, 0
      %s27 = sadd.s32 %s26, 1
      %s28 = scalar_select %p25, %s26, %s27
      %p31 = pneg %p25
      %p32 = scmp.eq.s32.totalorder %s16, 1
      %p33 = por %p31, %p32
      %p34 = scmp.ne.s32.totalorder %s26, %s29
      %p35 = scmp.eq.s32.totalorder %s16, 0
      %p36 = por %p34, %p35
      %p37 = scmp.ne.s32.totalorder %s26, %s29
      %p38 = scmp.eq.s32.totalorder %s21, 1
      %p39 = por %p37, %p38
      %p40 = scmp.ne.s32.totalorder %s29, %s30
      %p41 = scmp.eq.s32.totalorder %s21, 0
      %p42 = por %p40, %p41
      %p43 = scmp.ne.s32.totalorder %s29, %s30
      %p44 = scmp.eq.s32.totalorder %s22, 1
      %p45 = por %p43, %p44
      %p47 = scmp.ne.s32.totalorder %s30, %s46
      %p48 = scmp.eq.s32.totalorder %s22, 0
      %p49 = por %p47, %p48
      %s51 = sadd.s32 %s50, 1
      %p54 = scmp.eq.s32.totalorder %s16, 1
      %p55 = scmp.ne.s32.totalorder %s50, %s52
      %p56 = scmp.eq.s32.totalorder %s16, 0
      %p57 = por %p55, %p56
      %p58 = scmp.ne.s32.totalorder %s50, %s52
      %p59 = scmp.eq.s32.totalorder %s21, 1
      %p60 = por %p58, %p59
      %p61 = scmp.ne.s32.totalorder %s52, %s53
      %p62 = scmp.eq.s32.totalorder %s21, 0
      %p63 = por %p61, %p62
      %p64 = scmp.ne.s32.totalorder %s52, %s53
      %p65 = scmp.eq.s32.totalorder %s22, 1
      %p66 = por %p64, %p65
      %p68 = scmp.ne.s32.totalorder %s53, %s67
      %p69 = scmp.eq.s32.totalorder %s22, 0
      %p70 = por %p68, %p69
      %s72 = sadd.s32 %s71, 1
      %p75 = scmp.eq.s32.totalorder %s16, 1
      %p76 = scmp.ne.s32.totalorder %s71, %s73
      %p77 = scmp.eq.s32.totalorder %s16, 0
      %p78 = por %p76, %p77
      %p79 = scmp.ne.s32.totalorder %s71, %s73
      %p80 = scmp.eq.s32.totalorder %s21, 1
      %p81 = por %p79, %p80
      %p82 = scmp.ne.s32.totalorder %s73, %s74
      %p83 = scmp.eq.s32.totalorder %s21, 0
      %p84 = por %p82, %p83
      %p85 = scmp.ne.s32.totalorder %s73, %s74
      %p86 = scmp.eq.s32.totalorder %s22, 1
      %p87 = por %p85, %p86
      %p89 = scmp.ne.s32.totalorder %s74, %s88
      %p90 = scmp.eq.s32.totalorder %s22, 0
      %p91 = por %p89, %p90
      %s93 = sadd.s32 %s92, 1
      %p96 = scmp.eq.s32.totalorder %s16, 1
      %p97 = scmp.ne.s32.totalorder %s92, %s94
      %p98 = scmp.eq.s32.totalorder %s16, 0
      %p99 = por %p97, %p98
      %p100 = scmp.ne.s32.totalorder %s92, %s94
      %p101 = scmp.eq.s32.totalorder %s21, 1
      %p102 = por %p100, %p101
      %p103 = scmp.ne.s32.totalorder %s94, %s95
      %p104 = scmp.eq.s32.totalorder %s21, 0
      %p105 = por %p103, %p104
      %p106 = scmp.ne.s32.totalorder %s94, %s95
      %p107 = scmp.eq.s32.totalorder %s22, 1
      %p108 = por %p106, %p107
      %p110 = scmp.ne.s32.totalorder %s95, %s109
      %p111 = scmp.eq.s32.totalorder %s22, 0
      %p112 = por %p110, %p111
      %s113 = ssub.s32 %s16, %s23
      %p114 = scmp.eq.s32.totalorder %s113, 0
      %s116 = sadd.s32 %s115, 1
      %s117 = scalar_select %p114, %s115, %s116
      %p120 = pneg %p114
      %p121 = scmp.eq.s32.totalorder %s16, 1
      %p122 = por %p120, %p121
      %p123 = scmp.ne.s32.totalorder %s115, %s118
      %p124 = scmp.eq.s32.totalorder %s16, 0
      %p125 = por %p123, %p124
      %p126 = scmp.ne.s32.totalorder %s115, %s118
      %p127 = scmp.eq.s32.totalorder %s21, 1
      %p128 = por %p126, %p127
      %p129 = scmp.ne.s32.totalorder %s118, %s119
      %p130 = scmp.eq.s32.totalorder %s21, 0
      %p131 = por %p129, %p130
      %p132 = scmp.ne.s32.totalorder %s118, %s119
      %p133 = scmp.eq.s32.totalorder %s22, 1
      %p134 = por %p132, %p133
      %p136 = scmp.ne.s32.totalorder %s119, %s135
      %p137 = scmp.eq.s32.totalorder %s22, 0
      %p138 = por %p136, %p137
      %p139 = scmp.le.s32.totalorder 1, %s16
      %p140 = scmp.lt.s32.totalorder %s16, 3
      %p141 = pnand %p139, %p140
      %p142 = pneg %p141
      // Predicated region
      $region9: #{tpu_custom_call.1} parent=5 // pred_check
        _
      $region10: #{tpu_custom_call.1} parent=5 // pred_check_branch
        %144 = sbr.rel (%p141) target = $region12
      $region11: #{tpu_custom_call.1} parent=5 // pred_region
        %s145 = ssub.s32 %s16, 1
        // Predicated region
        $region13: #{tpu_custom_call.1} parent=11 // pred_check
          %p146 = pneg %p63
        $region14: #{tpu_custom_call.1} parent=11 // pred_check_branch
          %148 = sbr.rel (%p146) target = $region16
        $region15: #{tpu_custom_call.1} parent=11 // pred_region
          _
        $region16: #{tpu_custom_call.1} parent=11 // pred_fallthru
          _
        // Predicated region
        $region17: #{tpu_custom_call.1} parent=11 // pred_check
          %p149 = pneg %p84
        $region18: #{tpu_custom_call.1} parent=11 // pred_check_branch
          %151 = sbr.rel (%p149) target = $region20
        $region19: #{tpu_custom_call.1} parent=11 // pred_region
          _
        $region20: #{tpu_custom_call.1} parent=11 // pred_fallthru
          _
        // Predicated region
        $region21: #{tpu_custom_call.1} parent=11 // pred_check
          %p152 = pneg %p105
        $region22: #{tpu_custom_call.1} parent=11 // pred_check_branch
          %154 = sbr.rel (%p152) target = $region24
        $region23: #{tpu_custom_call.1} parent=11 // pred_region
          _
        $region24: #{tpu_custom_call.1} parent=11 // pred_fallthru
          _
      $region12: #{tpu_custom_call.1} parent=5 // pred_fallthru
        _
      %p155 = scmp.lt.s32.totalorder %s16, 2
      // Predicated region
      $region25: #{tpu_custom_call.1} parent=5 // pred_check
        %p156 = pneg %p155
      $region26: #{tpu_custom_call.1} parent=5 // pred_check_branch
        %158 = sbr.rel (%p156) target = $region28
      $region27: #{tpu_custom_call.1} parent=5 // pred_region
        // Predicated region
        $region29: #{tpu_custom_call.1} parent=27 // pred_check
          %p159 = pneg %p36
        $region30: #{tpu_custom_call.1} parent=27 // pred_check_branch
          %161 = sbr.rel (%p159) target = $region32
        $region31: #{tpu_custom_call.1} parent=27 // pred_region
          %s162 = sand.u32 %s26, 1
          %s163 = scalar_lea.sflag [#allocation3], %s162
          %s164 = sand.u32 %s26, 1
          %s165 = smul.addr %s164, 8
          %s166 = scalar_lea.vmem [#allocation2], %s165
          %s168 = ssub.s32 128, 128
          %169 = vsyncadd %s163, %s168
          %s170 = smul.addr %s16, 2
          %s171 = smul.addr %s170, 64
          %s172 = scalar_lea.hbm %s0, %s171
          %s174 = sshll.u32 %s166, 4
          %s175 = int_to_ptr.vmem [resolvable:$true] %s174
          %177 = dma.hbm_to_vmem [thread:$0]  %s172, 128, %s175, %s163
        $region32: #{tpu_custom_call.1} parent=27 // pred_fallthru
          _
      $region28: #{tpu_custom_call.1} parent=5 // pred_fallthru
        _
      %p178 = scmp.le.s32.totalorder 1, %s16
      %p179 = scmp.lt.s32.totalorder %s16, 3
      %p180 = pnand %p178, %p179
      %p181 = pneg %p180
      // Predicated region
      $region33: #{tpu_custom_call.1} parent=5 // pred_check
        _
      $region34: #{tpu_custom_call.1} parent=5 // pred_check_branch
        %183 = sbr.rel (%p180) target = $region36
      $region35: #{tpu_custom_call.1} parent=5 // pred_region
        %s184 = ssub.s32 %s16, 1
        %s185 = sand.u32 %s29, 1
        %s186 = scalar_lea.sflag [#allocation3], %s185
        %s187 = sand.u32 %s29, 1
        %s188 = smul.addr %s187, 8
        %s189 = scalar_lea.vmem [#allocation2], %s188
        // Predicated region
        $region37: #{tpu_custom_call.1} parent=35 // pred_check
          %p190 = pneg %p42
        $region38: #{tpu_custom_call.1} parent=35 // pred_check_branch
          %192 = sbr.rel (%p190) target = $region40
        $region39: #{tpu_custom_call.1} parent=35 // pred_region
          %193 = dma.done %s186, 128
        $region40: #{tpu_custom_call.1} parent=35 // pred_fallthru
          _
        %s194 = sand.u32 %s29, 1
        %s195 = scalar_lea.sflag [#allocation3], %s194
        %s196 = sand.u32 %s29, 1
        %s197 = smul.addr %s196, 8
        %s198 = scalar_lea.vmem [#allocation2], %s197
        %p199 = pneg %p42
        %p200 = pneg %p39
        %p201 = pneg %p63
        %p202 = pneg %p60
        %p203 = pneg %p84
        %p204 = pneg %p81
        %p205 = pneg %p105
        %p206 = pneg %p102
        %p207 = pneg %p131
        %p208 = pneg %p128
        %s209 = sand.u32 %s118, 1
        %s210 = scalar_lea.sflag [#allocation4], %s209
        %s211 = sand.u32 %s118, 1
        %s212 = smul.addr %s211, 8
        %s213 = scalar_lea.vmem [#allocation5], %s212
        %v214 = vld [vmem:[%s189] sm:$0xff]
        %v215 = vld [vmem:[%s1] sm:$0x3]
        %v216 = vld [vmem:[%s2] sm:$0xf]
        %v217 = vld [vmem:[%s3] sm:$0xf]
        %v219 = vlaneseq
        %v220 = vshrl.u32 %v219, 7
        %v221 = vsub.s32 0, %v220
        %v222 = vrot.slane %v215, %v221
        %v223 = vlaneseq
        %v224 = vshrl.u32 %v223, 7
        %v225 = vsub.s32 1, %v224
        %v226 = vrot.slane %v215, %v225
        %v227 = vcombine.low %v222, %v226
        %v229 = vmul.f32 %v214, %v227
        %v231 = vcombine.high %v229, %v229
        %vm233 = vcmask 1043456
        %v234 = vsel %vm233, %v229, 0.0
        %v235 = vsel %vm233, %v231, 0.0
        %v236 = vadd.f32 %v234, %v235
        %237 = vadd.xlane.f32.xlu0 %v236
        %v238 = vpop.xlane.xlu0 %237
        %v239 = vsel %vm233, %v238, 0.0
        %v240 = vrot.slane %v239, 4
        %v241 = vadd.f32 %v239, %v240
        %v242 = vrot.slane %v241, 2
        %v243 = vadd.f32 %v241, %v242
        %v244 = vrot.slane %v243, 1
        %v245 = vadd.f32 %v243, %v244
        %v246 = vrcp.pop 4.0
        %v247 = vmul.f32 %v245, %v246
        %v248 = vsub.f32 %v238, %v247
        %v249 = vmul.f32 %v248, %v248
        %v250 = vsel %vm233, %v249, 0.0
        %v251 = vrot.slane %v250, 4
        %v252 = vadd.f32 %v250, %v251
        %v253 = vrot.slane %v252, 2
        %v254 = vadd.f32 %v252, %v253
        %v255 = vrot.slane %v254, 1
        %v256 = vadd.f32 %v254, %v255
        %v257 = vmul.f32 %v256, %v246
        %v258 = vmul.f32 %v216, %v248
        %v259 = vadd.f32 %v257, 1e-05
        %v260 = vrsqrt.pop %v259
        %v261 = vmul.f32 %v258, %v260
        %v262 = vadd.f32 %v261, %v217
        %v264 = vcombine.high %v214, %v214
        %v266 = vsel %vm233, %v214, 0.0
        %v267 = vrot.slane %v266, 4
        %v268 = vadd.f32 %v266, %v267
        %v269 = vrot.slane %v268, 2
        %v270 = vadd.f32 %v268, %v269
        %v271 = vrot.slane %v270, 1
        %v272 = vadd.f32 %v270, %v271
        %v273 = vsel %vm233, %v264, 0.0
        %v274 = vrot.slane %v273, 4
        %v275 = vadd.f32 %v273, %v274
        %v276 = vrot.slane %v275, 2
        %v277 = vadd.f32 %v275, %v276
        %v278 = vrot.slane %v277, 1
        %v279 = vadd.f32 %v277, %v278
        %v280 = vmul.f32 %v272, %v246
        %v281 = vmul.f32 %v279, %v246
        %283 = vset.pattern.permute.xlu0 0
        %284 = vperm.xlu0 %283, %v262
        %v285 = vpop.permute.xlu0 %284
        %v287 = vadd.f32 %v285, %v280
        %v288 = vadd.f32 %v285, %v281
        %v289 = vxor.u32 %v287, 2147483648
        %v290 = vxor.u32 %v288, 2147483648
        %v291 = vmul.f32 %v289, 1.442695
        %v292 = vpow.pop %v291
        %v293 = vmul.f32 %v290, 1.442695
        %v294 = vpow.pop %v293
        %v295 = vadd.f32 %v292, 1.0
        %v296 = vadd.f32 %v294, 1.0
        %v297 = vrcp.pop %v295
        %v298 = vmul.f32 1.0, %v297
        %v299 = vrcp.pop %v296
        %v300 = vmul.f32 1.0, %v299
        %v303 = vcombine.low %v298, %v300
        %v305 = vmul.f32 %v214, %v303
        %306 = vst [vmem:[%s213] sm:$0xff] %v305
        %s307 = sand.u32 %s118, 1
        %s308 = scalar_lea.sflag [#allocation4], %s307
        %s309 = sand.u32 %s118, 1
        %s310 = smul.addr %s309, 8
        %s311 = scalar_lea.vmem [#allocation5], %s310
        // Predicated region
        $region41: #{tpu_custom_call.1} parent=35 // pred_check
          %p312 = pneg %p128
        $region42: #{tpu_custom_call.1} parent=35 // pred_check_branch
          %314 = sbr.rel (%p312) target = $region44
        $region43: #{tpu_custom_call.1} parent=35 // pred_region
          %s316 = ssub.s32 128, 128
          %317 = vsyncadd %s308, %s316
          %s318 = smul.addr %s21, 2
          %s319 = smul.addr %s318, 64
          %s320 = scalar_lea.hbm %s4, %s319
          %s322 = sshll.u32 %s311, 4
          %s323 = int_to_ptr.vmem [resolvable:$true] %s322
          %325 = dma.vmem_to_hbm [thread:$0]  %s323, 128, %s320, %s308
        $region44: #{tpu_custom_call.1} parent=35 // pred_fallthru
          _
      $region36: #{tpu_custom_call.1} parent=5 // pred_fallthru
        _
      %p326 = scmp.le.s32.totalorder 2, %s16
      // Predicated region
      $region45: #{tpu_custom_call.1} parent=5 // pred_check
        %p327 = pneg %p326
      $region46: #{tpu_custom_call.1} parent=5 // pred_check_branch
        %329 = sbr.rel (%p327) target = $region48
      $region47: #{tpu_custom_call.1} parent=5 // pred_region
        %s330 = ssub.s32 %s16, 2
        // Predicated region
        $region49: #{tpu_custom_call.1} parent=47 // pred_check
          %p331 = pneg %p134
        $region50: #{tpu_custom_call.1} parent=47 // pred_check_branch
          %333 = sbr.rel (%p331) target = $region52
        $region51: #{tpu_custom_call.1} parent=47 // pred_region
          %s334 = sand.u32 %s119, 1
          %s335 = scalar_lea.sflag [#allocation4], %s334
          %s336 = sand.u32 %s119, 1
          %s337 = smul.addr %s336, 8
          %s338 = scalar_lea.vmem [#allocation5], %s337
          %339 = dma.done %s335, 128
        $region52: #{tpu_custom_call.1} parent=47 // pred_fallthru
          _
      $region48: #{tpu_custom_call.1} parent=5 // pred_fallthru
        _
    $region6: #{tpu_custom_call.1} parent=1 // loop_footer
      %s20 = sadd.s32 1, %s16
    $region7: #{tpu_custom_call.1} parent=1 // loop_footer_branch
      %15 = sbr.rel target = $region3
    $region8: #{tpu_custom_call.1} parent=1 // loop_exit
      _
    %340 = vsyncpa [#allocation3], 1
    %s341 = scalar_lea.sflag [#allocation3], 1
    %342 = vsyncpa %s341, 1
    %343 = vsyncpa [#allocation4], 1
    %s344 = scalar_lea.sflag [#allocation4], 1
    %345 = vsyncpa %s344, 1

</llo_original>
